<compile_context>
chip_gen: v7x
topology: tpu7x:2x2x1
jax: 0.10.0
libtpu: 0.0.40
codegen_flags: <defaults>
</compile_context>

<pallas_src>
import math

import jax
import jax.numpy as jnp
from jax.experimental import pallas as pl
from jax.experimental.pallas import tpu as pltpu

BBOX_XFORM_CLIP = math.log(1000.0 / 16.0)   # maskrcnn_benchmark BoxCoder default
TO_REMOVE = 1.0                              # maskrcnn_benchmark box convention
LANE = 128


# ----------------------------------------------------------------------------
# device-aware tiling helpers (perf only; wrong guesses never affect results)
# ----------------------------------------------------------------------------
def _device_kind():
    try:
        return jax.devices()[0].device_kind.lower()
    except Exception:
        return ""


def _num_tensorcores():
    """2 for megacore / multi-TC chips (v4, v5p, v7x), else 1."""
    kind = _device_kind()
    if "lite" in kind or "v5e" in kind or "v6" in kind:
        return 1
    if "v4" in kind or "v5p" in kind or "v7" in kind:
        return 2
    return 1


def _default_max_tile_r():
    """Row budget per block: 1024 rows (2 MiB/coord-slab) on v6e/v7x where the
    scoped-VMEM default is 32 MiB; 512 on v5e (16 MiB default) / unknown."""
    kind = _device_kind()
    if "v6" in kind or "v7" in kind:
        return 1024
    return 512


def _plan_tiling(N, R, max_tile_r, num_tc, max_nb=8):
    """Pick (images-per-block nb, rows-per-block tile_r).

    Invariants: nb divides N, tile_r divides R, and tile_r is a multiple of 8
    or equal to R (so the last-two block dims always satisfy the (8,128) rule
    and every store is an unmasked full-tile vst).
    """
    # (1) R-axis tile: whole per-image slab when it fits (one contiguous DMA
    #     per array per step); otherwise the largest multiple of 8 <= budget
    #     that divides R.
    if R <= max_tile_r:
        tile_r = R
    else:
        tile_r = R                       # fallback: no aligned divisor found
        t = (max_tile_r // 8) * 8
        while t >= 8:
            if R % t == 0:
                tile_r = t
                break
            t -= 8

    # (2) batch several images into one grid step when per-image slabs are
    #     small, amortizing the ~0.35 us fixed per-step pipeline overhead.
    nb = 1
    if tile_r == R:
        for d in range(min(N, max_nb), 0, -1):
            if N % d == 0 and d * R <= max_tile_r:
                nb = d
                break

    # (3) multi-TensorCore chips only: keep >= 2 grid steps per core so both
    #     cores get pipelined work.  Single-TC chips keep the fattest blocks.
    if num_tc >= 2:
        want = 2 * num_tc
        while (N // nb) * (R // tile_r) < want and nb > 1:
            nb_next = nb // 2
            while nb_next > 1 and N % nb_next:
                nb_next -= 1
            nb = max(nb_next, 1)
        while (N // nb) * (R // tile_r) < want and tile_r % 16 == 0:
            tile_r //= 2                 # halves stay multiples of 8, divide R

    return nb, tile_r


# ----------------------------------------------------------------------------
# Pallas kernel: BoxCoder(1,1,1,1).decode + clip_to_image
# ----------------------------------------------------------------------------
def _rpn_decode_kernel(imsz_ref, anch_ref, delta_ref, box_ref):
    """One grid step decodes an (nb, 4, tile_r, 128) sublane/lane-dense slab.

    NOTE: grid axis 0 MUST remain the image-block axis -- the SMEM image-size
    table is indexed with program_id(0) * nb + b.
    """
    nb = anch_ref.shape[0]
    img_base = pl.program_id(0) * nb

    for b in range(nb):                              # nb <= 8, static unroll
        max_x = imsz_ref[img_base + b, 0] - 1.0      # im_w - 1
        max_y = imsz_ref[img_base + b, 1] - 1.0      # im_h - 1

        # per-coordinate (tile_r, 128) slabs, read straight from the ref
        x1 = anch_ref[b, 0]
        y1 = anch_ref[b, 1]
        x2 = anch_ref[b, 2]
        y2 = anch_ref[b, 3]

        widths = x2 - x1 + TO_REMOVE
        heights = y2 - y1 + TO_REMOVE
        ctr_x = x1 + 0.5 * widths
        ctr_y = y1 + 0.5 * heights

        # BoxCoder weights are (1, 1, 1, 1) -> no division needed.
        dx = delta_ref[b, 0]
        dy = delta_ref[b, 1]
        dw = jnp.minimum(delta_ref[b, 2], BBOX_XFORM_CLIP)
        dh = jnp.minimum(delta_ref[b, 3], BBOX_XFORM_CLIP)

        pred_ctr_x = dx * widths + ctr_x
        pred_ctr_y = dy * heights + ctr_y
        pred_w = jnp.exp(dw) * widths
        pred_h = jnp.exp(dh) * heights

        # clip_to_image (remove_empty=False in the RPN postprocessor).
        # Four direct tile-aligned stores (no jnp.stack temporary).
        box_ref[b, 0] = jnp.clip(pred_ctr_x - 0.5 * pred_w, 0.0, max_x)
        box_ref[b, 1] = jnp.clip(pred_ctr_y - 0.5 * pred_h, 0.0, max_y)
        box_ref[b, 2] = jnp.clip(pred_ctr_x + 0.5 * pred_w - 1.0, 0.0, max_x)
        box_ref[b, 3] = jnp.clip(pred_ctr_y + 0.5 * pred_h - 1.0, 0.0, max_y)


def rpn_decode(anchors, deltas, image_sizes_wh, *, max_tile_r=None):
    """
    anchors, deltas : f32[N, 4, A]  (coordinate-major; A % 128 == 0)
    image_sizes_wh  : [N, 2]        (width, height) per image (SMEM prefetch)
    returns boxes   : f32[N, 4, A]  decoded + clipped proposal boxes
    """
    N, four, A = anchors.shape
    assert four == 4 and A % LANE == 0
    R = A // LANE

    if max_tile_r is None:
        max_tile_r = _default_max_tile_r()
    num_tc = _num_tensorcores()

    # If R must be tiled but has no aligned divisor, pad rows up to a multiple
    # of 8 so blocks stay (8,128)-aligned (padded rows are sliced off below).
    R_pad = R
    if R > max_tile_r and R % 8:
        R_pad = ((R + 7) // 8) * 8
        pad = (R_pad - R) * LANE
        anchors = jnp.pad(anchors, ((0, 0), (0, 0), (0, pad)))
        deltas = jnp.pad(deltas, ((0, 0), (0, 0), (0, pad)))

    nb, tile_r = _plan_tiling(N, R_pad, max_tile_r, num_tc)

    anchors_r = anchors.reshape(N, 4, R_pad, LANE)
    deltas_r = deltas.reshape(N, 4, R_pad, LANE)
    image_sizes_wh = jnp.asarray(image_sizes_wh, jnp.float32)

    grid = (N // nb, R_pad // tile_r)
    coord_spec = pl.BlockSpec((nb, 4, tile_r, LANE),
                              lambda n, r, imsz: (n, 0, r, 0))

    boxes = pl.pallas_call(
        _rpn_decode_kernel,
        out_shape=jax.ShapeDtypeStruct((N, 4, R_pad, LANE), jnp.float32),
        grid_spec=pltpu.PrefetchScalarGridSpec(
            num_scalar_prefetch=1,            # image_sizes_wh -> SMEM
            grid=grid,
            in_specs=[coord_spec, coord_spec],
            out_specs=coord_spec,
        ),
        compiler_params=pltpu.CompilerParams(
            dimension_semantics=("parallel", "parallel")),
    )(image_sizes_wh, anchors_r, deltas_r)

    return boxes.reshape(N, 4, R_pad * LANE)[:, :, :A]


# ----------------------------------------------------------------------------
# plain-JAX decode (reference AND the fused small-k hot path)
# ----------------------------------------------------------------------------
def _decode_clip_jax(anchors, deltas, image_sizes_wh):
    """BoxCoder(1,1,1,1).decode + clip_to_image on (N, 4, K) arrays."""
    x1, y1, x2, y2 = [anchors[:, i, :] for i in range(4)]
    w = x2 - x1 + TO_REMOVE
    h = y2 - y1 + TO_REMOVE
    cx = x1 + 0.5 * w
    cy = y1 + 0.5 * h
    dx, dy = deltas[:, 0, :], deltas[:, 1, :]
    dw = jnp.minimum(deltas[:, 2, :], BBOX_XFORM_CLIP)
    dh = jnp.minimum(deltas[:, 3, :], BBOX_XFORM_CLIP)
    pcx = dx * w + cx
    pcy = dy * h + cy
    pw = jnp.exp(dw) * w
    ph = jnp.exp(dh) * h
    im_w = image_sizes_wh[:, 0:1]
    im_h = image_sizes_wh[:, 1:2]
    px1 = jnp.clip(pcx - 0.5 * pw, 0.0, im_w - 1.0)
    py1 = jnp.clip(pcy - 0.5 * ph, 0.0, im_h - 1.0)
    px2 = jnp.clip(pcx + 0.5 * pw - 1.0, 0.0, im_w - 1.0)
    py2 = jnp.clip(pcy + 0.5 * ph - 1.0, 0.0, im_h - 1.0)
    return jnp.stack([px1, py1, px2, py2], axis=1)


# ----------------------------------------------------------------------------
# forward glue mirroring RPNModule._forward_test
# ----------------------------------------------------------------------------
def rpn_module_forward(anchors_n4a, deltas_n4a, objectness_n1a, image_sizes_wh,
                       pre_nms_top_n=64, min_pallas_rows=8):
    """Top-k on objectness FIRST (maskrcnn_benchmark ordering), then decode +
    clip only the k survivors."""
    N, _, A = anchors_n4a.shape
    k = min(pre_nms_top_n, A)

    logits = objectness_n1a[:, 0, :]                       # (N, A) raw logits
    # sigmoid is monotone -> top_k on raw logits selects the same anchors.
    top_logits, top_idx = jax.lax.top_k(logits, k)
    top_scores = jax.nn.sigmoid(top_logits)

    idx = jnp.broadcast_to(top_idx[:, None, :], (N, 4, k))
    sel_anchors = jnp.take_along_axis(anchors_n4a, idx, axis=2)   # (N, 4, k)
    sel_deltas = jnp.take_along_axis(deltas_n4a, idx, axis=2)
    image_sizes_wh = jnp.asarray(image_sizes_wh, jnp.float32)

    k_pad = ((k + LANE - 1) // LANE) * LANE
    if (k_pad // LANE) >= min_pallas_rows:
        # big selected slab: Pallas decode (sublane/lane-dense blocks).
        pad = k_pad - k
        if pad:
            sel_anchors = jnp.pad(sel_anchors, ((0, 0), (0, 0), (0, pad)))
            sel_deltas = jnp.pad(sel_deltas, ((0, 0), (0, 0), (0, pad)))
        boxes = rpn_decode(sel_anchors, sel_deltas, image_sizes_wh)[:, :, :k]
    else:
        # small-k hot path: plain JAX, fused by XLA with the gather above --
        # avoids an extra kernel launch and an HBM round trip of sel_* / pad.
        boxes = _decode_clip_jax(sel_anchors, sel_deltas, image_sizes_wh)

    # TODO(synk): NMS + remove_small_boxes + post_nms_top_n (data-dependent
    #             suppression) have no clean Pallas equivalent; omitted.
    # TODO(synk): training path (loss_evaluator: anchor/target IoU matching,
    #             BCE-with-logits + smooth-L1) not implemented.
    return boxes, top_scores


# ----------------------------------------------------------------------------
# self-test
# ----------------------------------------------------------------------------
def _make_inputs(key, N, A):
    k1, k2, k3, k4 = jax.random.split(key, 4)
    xy = jax.random.uniform(k1, (N, A, 2), jnp.float32, 0.0, 200.0)
    wh = jax.random.uniform(k2, (N, A, 2), jnp.float32, 8.0, 64.0)
    anchors = jnp.transpose(jnp.concatenate([xy, xy + wh], axis=-1), (0, 2, 1))
    deltas = jax.random.normal(k3, (N, 4, A), jnp.float32) * 0.5
    objectness = jax.random.normal(k4, (N, 1, A), jnp.float32)
    return anchors, deltas, objectness


def _check_forward(anchors, deltas, objectness, image_sizes_wh, pre_nms_top_n):
    boxes, scores = jax.block_until_ready(
        rpn_module_forward(anchors, deltas, objectness, image_sizes_wh,
                           pre_nms_top_n=pre_nms_top_n))
    N, _, A = anchors.shape
    k = scores.shape[1]
    _, ref_idx = jax.lax.top_k(objectness[:, 0, :], k)
    idx = jnp.broadcast_to(ref_idx[:, None, :], (N, 4, k))
    ref_boxes = _decode_clip_jax(
        jnp.take_along_axis(anchors, idx, axis=2),
        jnp.take_along_axis(deltas, idx, axis=2),
        jnp.asarray(image_sizes_wh, jnp.float32))
    ref_scores = jax.nn.sigmoid(
        jnp.take_along_axis(objectness[:, 0, :], ref_idx, axis=1))
    assert jnp.allclose(boxes, ref_boxes, atol=1e-4, rtol=1e-4)
    assert jnp.allclose(scores, ref_scores, atol=1e-6, rtol=1e-5)


if __name__ == "__main__":
    key = jax.random.PRNGKey(0)
    image_sizes_wh = jnp.array([[256.0, 192.0], [224.0, 224.0]], jnp.float32)

    # --- dense decode kernel correctness check (all anchors, Pallas) ---
    N, A = 2, 512
    anchors, deltas, objectness = _make_inputs(key, N, A)
    boxes = jax.block_until_ready(rpn_decode(anchors, deltas, image_sizes_wh))
    ref_boxes = _decode_clip_jax(anchors, deltas, image_sizes_wh)
    assert jnp.allclose(boxes, ref_boxes, atol=1e-4, rtol=1e-4)

    # --- full forward, small-k path (plain JAX decode fused with gather) ---
    _check_forward(anchors, deltas, objectness, image_sizes_wh,
                   pre_nms_top_n=64)

    # --- full forward, large-k path (Pallas decode of the selected slab) ---
    anchors2, deltas2, objectness2 = _make_inputs(jax.random.PRNGKey(1), 2, 2048)
    _check_forward(anchors2, deltas2, objectness2, image_sizes_wh,
                   pre_nms_top_n=1024)

    print("KERNEL_OK")
</pallas_src>

<mosaic_0001>
module attributes {stable_mosaic.version = 11 : i64} {
  func.func @_rpn_decode_kernel(%arg0: i32, %arg1: i32, %arg2: memref<2x2xf32, #tpu.memory_space<smem>>, %arg3: memref<2x4x4x128xf32, #tpu.memory_space<vmem>>, %arg4: memref<2x4x4x128xf32, #tpu.memory_space<vmem>>, %arg5: memref<2x4x4x128xf32, #tpu.memory_space<vmem>>) attributes {dimension_semantics = [#tpu.dimension_semantics<parallel>, #tpu.dimension_semantics<parallel>], iteration_bounds = array<i64: 1, 1>, scalar_prefetch = 1 : i64, scratch_operands = 0 : i64, tpu.core_type = #tpu.core_type<tc>, window_params = [{transform_indices = @transform_0, window_bounds = array<i64: 2, 4, 4, 128>}, {transform_indices = @transform_1, window_bounds = array<i64: 2, 4, 4, 128>}, {transform_indices = @transform_2, window_bounds = array<i64: 2, 4, 4, 128>}]} {
    %c2_i32 = arith.constant 2 : i32
    %0 = arith.muli %arg0, %c2_i32 : i32
    %c0_i32 = arith.constant 0 : i32
    %1 = arith.addi %0, %c0_i32 : i32
    %2 = arith.index_cast %1 : i32 to index
    %c0 = arith.constant 0 : index
    %3 = memref.load %arg2[%2, %c0] : memref<2x2xf32, #tpu.memory_space<smem>>
    %cst = arith.constant 1.000000e+00 : f32
    %4 = arith.subf %3, %cst : f32
    %c0_i32_0 = arith.constant 0 : i32
    %5 = arith.addi %0, %c0_i32_0 : i32
    %6 = arith.index_cast %5 : i32 to index
    %c1 = arith.constant 1 : index
    %7 = memref.load %arg2[%6, %c1] : memref<2x2xf32, #tpu.memory_space<smem>>
    %cst_1 = arith.constant 1.000000e+00 : f32
    %8 = arith.subf %7, %cst_1 : f32
    %c0_2 = arith.constant 0 : index
    %c0_3 = arith.constant 0 : index
    %c0_4 = arith.constant 0 : index
    %c0_5 = arith.constant 0 : index
    %9 = vector.load %arg3[%c0_2, %c0_3, %c0_4, %c0_5] : memref<2x4x4x128xf32, #tpu.memory_space<vmem>>, vector<1x1x4x128xf32>
    %10 = vector.shape_cast %9 : vector<1x1x4x128xf32> to vector<4x128xf32>
    %c0_6 = arith.constant 0 : index
    %c1_7 = arith.constant 1 : index
    %c0_8 = arith.constant 0 : index
    %c0_9 = arith.constant 0 : index
    %11 = vector.load %arg3[%c0_6, %c1_7, %c0_8, %c0_9] : memref<2x4x4x128xf32, #tpu.memory_space<vmem>>, vector<1x1x4x128xf32>
    %12 = vector.shape_cast %11 : vector<1x1x4x128xf32> to vector<4x128xf32>
    %c0_10 = arith.constant 0 : index
    %c2 = arith.constant 2 : index
    %c0_11 = arith.constant 0 : index
    %c0_12 = arith.constant 0 : index
    %13 = vector.load %arg3[%c0_10, %c2, %c0_11, %c0_12] : memref<2x4x4x128xf32, #tpu.memory_space<vmem>>, vector<1x1x4x128xf32>
    %14 = vector.shape_cast %13 : vector<1x1x4x128xf32> to vector<4x128xf32>
    %c0_13 = arith.constant 0 : index
    %c3 = arith.constant 3 : index
    %c0_14 = arith.constant 0 : index
    %c0_15 = arith.constant 0 : index
    %15 = vector.load %arg3[%c0_13, %c3, %c0_14, %c0_15] : memref<2x4x4x128xf32, #tpu.memory_space<vmem>>, vector<1x1x4x128xf32>
    %16 = vector.shape_cast %15 : vector<1x1x4x128xf32> to vector<4x128xf32>
    %17 = arith.subf %14, %10 : vector<4x128xf32>
    %cst_16 = arith.constant 1.000000e+00 : f32
    %18 = vector.broadcast %cst_16 : f32 to vector<4x128xf32>
    %19 = arith.addf %17, %18 : vector<4x128xf32>
    %20 = arith.subf %16, %12 : vector<4x128xf32>
    %cst_17 = arith.constant 1.000000e+00 : f32
    %21 = vector.broadcast %cst_17 : f32 to vector<4x128xf32>
    %22 = arith.addf %20, %21 : vector<4x128xf32>
    %cst_18 = arith.constant 5.000000e-01 : f32
    %23 = vector.broadcast %cst_18 : f32 to vector<4x128xf32>
    %24 = arith.mulf %23, %19 : vector<4x128xf32>
    %25 = arith.addf %10, %24 : vector<4x128xf32>
    %cst_19 = arith.constant 5.000000e-01 : f32
    %26 = vector.broadcast %cst_19 : f32 to vector<4x128xf32>
    %27 = arith.mulf %26, %22 : vector<4x128xf32>
    %28 = arith.addf %12, %27 : vector<4x128xf32>
    %c0_20 = arith.constant 0 : index
    %c0_21 = arith.constant 0 : index
    %c0_22 = arith.constant 0 : index
    %c0_23 = arith.constant 0 : index
    %29 = vector.load %arg4[%c0_20, %c0_21, %c0_22, %c0_23] : memref<2x4x4x128xf32, #tpu.memory_space<vmem>>, vector<1x1x4x128xf32>
    %30 = vector.shape_cast %29 : vector<1x1x4x128xf32> to vector<4x128xf32>
    %c0_24 = arith.constant 0 : index
    %c1_25 = arith.constant 1 : index
    %c0_26 = arith.constant 0 : index
    %c0_27 = arith.constant 0 : index
    %31 = vector.load %arg4[%c0_24, %c1_25, %c0_26, %c0_27] : memref<2x4x4x128xf32, #tpu.memory_space<vmem>>, vector<1x1x4x128xf32>
    %32 = vector.shape_cast %31 : vector<1x1x4x128xf32> to vector<4x128xf32>
    %c0_28 = arith.constant 0 : index
    %c2_29 = arith.constant 2 : index
    %c0_30 = arith.constant 0 : index
    %c0_31 = arith.constant 0 : index
    %33 = vector.load %arg4[%c0_28, %c2_29, %c0_30, %c0_31] : memref<2x4x4x128xf32, #tpu.memory_space<vmem>>, vector<1x1x4x128xf32>
    %34 = vector.shape_cast %33 : vector<1x1x4x128xf32> to vector<4x128xf32>
    %cst_32 = arith.constant 4.13516665 : f32
    %35 = vector.broadcast %cst_32 : f32 to vector<4x128xf32>
    %36 = arith.minimumf %34, %35 : vector<4x128xf32>
    %c0_33 = arith.constant 0 : index
    %c3_34 = arith.constant 3 : index
    %c0_35 = arith.constant 0 : index
    %c0_36 = arith.constant 0 : index
    %37 = vector.load %arg4[%c0_33, %c3_34, %c0_35, %c0_36] : memref<2x4x4x128xf32, #tpu.memory_space<vmem>>, vector<1x1x4x128xf32>
    %38 = vector.shape_cast %37 : vector<1x1x4x128xf32> to vector<4x128xf32>
    %cst_37 = arith.constant 4.13516665 : f32
    %39 = vector.broadcast %cst_37 : f32 to vector<4x128xf32>
    %40 = arith.minimumf %38, %39 : vector<4x128xf32>
    %41 = arith.mulf %30, %19 : vector<4x128xf32>
    %42 = arith.addf %41, %25 : vector<4x128xf32>
    %43 = arith.mulf %32, %22 : vector<4x128xf32>
    %44 = arith.addf %43, %28 : vector<4x128xf32>
    %45 = math.exp %36 : vector<4x128xf32>
    %46 = arith.mulf %45, %19 : vector<4x128xf32>
    %47 = math.exp %40 : vector<4x128xf32>
    %48 = arith.mulf %47, %22 : vector<4x128xf32>
    %cst_38 = arith.constant 5.000000e-01 : f32
    %49 = vector.broadcast %cst_38 : f32 to vector<4x128xf32>
    %50 = arith.mulf %49, %46 : vector<4x128xf32>
    %51 = arith.subf %42, %50 : vector<4x128xf32>
    %cst_39 = arith.constant 0.000000e+00 : f32
    %52 = vector.broadcast %cst_39 : f32 to vector<4x128xf32>
    %53 = arith.maximumf %52, %51 : vector<4x128xf32>
    %54 = vector.broadcast %4 : f32 to vector<4x128xf32>
    %55 = arith.minimumf %54, %53 : vector<4x128xf32>
    %c0_40 = arith.constant 0 : index
    %c0_41 = arith.constant 0 : index
    %c0_42 = arith.constant 0 : index
    %c0_43 = arith.constant 0 : index
    %56 = vector.load %arg5[%c0_40, %c0_41, %c0_42, %c0_43] : memref<2x4x4x128xf32, #tpu.memory_space<vmem>>, vector<1x1x4x128xf32>
    %57 = vector.shape_cast %56 : vector<1x1x4x128xf32> to vector<4x128xf32>
    %58 = vector.shape_cast %55 : vector<4x128xf32> to vector<1x1x4x128xf32>
    tpu.vector_store %arg5[%c0_40, %c0_41, %c0_42, %c0_43], %58 {strides = array<i32>} : memref<2x4x4x128xf32, #tpu.memory_space<vmem>>, vector<1x1x4x128xf32>,
    %cst_44 = arith.constant 5.000000e-01 : f32
    %59 = vector.broadcast %cst_44 : f32 to vector<4x128xf32>
    %60 = arith.mulf %59, %48 : vector<4x128xf32>
    %61 = arith.subf %44, %60 : vector<4x128xf32>
    %cst_45 = arith.constant 0.000000e+00 : f32
    %62 = vector.broadcast %cst_45 : f32 to vector<4x128xf32>
    %63 = arith.maximumf %62, %61 : vector<4x128xf32>
    %64 = vector.broadcast %8 : f32 to vector<4x128xf32>
    %65 = arith.minimumf %64, %63 : vector<4x128xf32>
    %c0_46 = arith.constant 0 : index
    %c1_47 = arith.constant 1 : index
    %c0_48 = arith.constant 0 : index
    %c0_49 = arith.constant 0 : index
    %66 = vector.load %arg5[%c0_46, %c1_47, %c0_48, %c0_49] : memref<2x4x4x128xf32, #tpu.memory_space<vmem>>, vector<1x1x4x128xf32>
    %67 = vector.shape_cast %66 : vector<1x1x4x128xf32> to vector<4x128xf32>
    %68 = vector.shape_cast %65 : vector<4x128xf32> to vector<1x1x4x128xf32>
    tpu.vector_store %arg5[%c0_46, %c1_47, %c0_48, %c0_49], %68 {strides = array<i32>} : memref<2x4x4x128xf32, #tpu.memory_space<vmem>>, vector<1x1x4x128xf32>,
    %cst_50 = arith.constant 5.000000e-01 : f32
    %69 = vector.broadcast %cst_50 : f32 to vector<4x128xf32>
    %70 = arith.mulf %69, %46 : vector<4x128xf32>
    %71 = arith.addf %42, %70 : vector<4x128xf32>
    %cst_51 = arith.constant 1.000000e+00 : f32
    %72 = vector.broadcast %cst_51 : f32 to vector<4x128xf32>
    %73 = arith.subf %71, %72 : vector<4x128xf32>
    %cst_52 = arith.constant 0.000000e+00 : f32
    %74 = vector.broadcast %cst_52 : f32 to vector<4x128xf32>
    %75 = arith.maximumf %74, %73 : vector<4x128xf32>
    %76 = vector.broadcast %4 : f32 to vector<4x128xf32>
    %77 = arith.minimumf %76, %75 : vector<4x128xf32>
    %c0_53 = arith.constant 0 : index
    %c2_54 = arith.constant 2 : index
    %c0_55 = arith.constant 0 : index
    %c0_56 = arith.constant 0 : index
    %78 = vector.load %arg5[%c0_53, %c2_54, %c0_55, %c0_56] : memref<2x4x4x128xf32, #tpu.memory_space<vmem>>, vector<1x1x4x128xf32>
    %79 = vector.shape_cast %78 : vector<1x1x4x128xf32> to vector<4x128xf32>
    %80 = vector.shape_cast %77 : vector<4x128xf32> to vector<1x1x4x128xf32>
    tpu.vector_store %arg5[%c0_53, %c2_54, %c0_55, %c0_56], %80 {strides = array<i32>} : memref<2x4x4x128xf32, #tpu.memory_space<vmem>>, vector<1x1x4x128xf32>,
    %cst_57 = arith.constant 5.000000e-01 : f32
    %81 = vector.broadcast %cst_57 : f32 to vector<4x128xf32>
    %82 = arith.mulf %81, %48 : vector<4x128xf32>
    %83 = arith.addf %44, %82 : vector<4x128xf32>
    %cst_58 = arith.constant 1.000000e+00 : f32
    %84 = vector.broadcast %cst_58 : f32 to vector<4x128xf32>
    %85 = arith.subf %83, %84 : vector<4x128xf32>
    %cst_59 = arith.constant 0.000000e+00 : f32
    %86 = vector.broadcast %cst_59 : f32 to vector<4x128xf32>
    %87 = arith.maximumf %86, %85 : vector<4x128xf32>
    %88 = vector.broadcast %8 : f32 to vector<4x128xf32>
    %89 = arith.minimumf %88, %87 : vector<4x128xf32>
    %c0_60 = arith.constant 0 : index
    %c3_61 = arith.constant 3 : index
    %c0_62 = arith.constant 0 : index
    %c0_63 = arith.constant 0 : index
    %90 = vector.load %arg5[%c0_60, %c3_61, %c0_62, %c0_63] : memref<2x4x4x128xf32, #tpu.memory_space<vmem>>, vector<1x1x4x128xf32>
    %91 = vector.shape_cast %90 : vector<1x1x4x128xf32> to vector<4x128xf32>
    %92 = vector.shape_cast %89 : vector<4x128xf32> to vector<1x1x4x128xf32>
    tpu.vector_store %arg5[%c0_60, %c3_61, %c0_62, %c0_63], %92 {strides = array<i32>} : memref<2x4x4x128xf32, #tpu.memory_space<vmem>>, vector<1x1x4x128xf32>,
    %c1_i32 = arith.constant 1 : i32
    %93 = arith.addi %0, %c1_i32 : i32
    %94 = arith.index_cast %93 : i32 to index
    %c0_64 = arith.constant 0 : index
    %95 = memref.load %arg2[%94, %c0_64] : memref<2x2xf32, #tpu.memory_space<smem>>
    %cst_65 = arith.constant 1.000000e+00 : f32
    %96 = arith.subf %95, %cst_65 : f32
    %c1_i32_66 = arith.constant 1 : i32
    %97 = arith.addi %0, %c1_i32_66 : i32
    %98 = arith.index_cast %97 : i32 to index
    %c1_67 = arith.constant 1 : index
    %99 = memref.load %arg2[%98, %c1_67] : memref<2x2xf32, #tpu.memory_space<smem>>
    %cst_68 = arith.constant 1.000000e+00 : f32
    %100 = arith.subf %99, %cst_68 : f32
    %c1_69 = arith.constant 1 : index
    %c0_70 = arith.constant 0 : index
    %c0_71 = arith.constant 0 : index
    %c0_72 = arith.constant 0 : index
    %101 = vector.load %arg3[%c1_69, %c0_70, %c0_71, %c0_72] : memref<2x4x4x128xf32, #tpu.memory_space<vmem>>, vector<1x1x4x128xf32>
    %102 = vector.shape_cast %101 : vector<1x1x4x128xf32> to vector<4x128xf32>
    %c1_73 = arith.constant 1 : index
    %c1_74 = arith.constant 1 : index
    %c0_75 = arith.constant 0 : index
    %c0_76 = arith.constant 0 : index
    %103 = vector.load %arg3[%c1_73, %c1_74, %c0_75, %c0_76] : memref<2x4x4x128xf32, #tpu.memory_space<vmem>>, vector<1x1x4x128xf32>
    %104 = vector.shape_cast %103 : vector<1x1x4x128xf32> to vector<4x128xf32>
    %c1_77 = arith.constant 1 : index
    %c2_78 = arith.constant 2 : index
    %c0_79 = arith.constant 0 : index
    %c0_80 = arith.constant 0 : index
    %105 = vector.load %arg3[%c1_77, %c2_78, %c0_79, %c0_80] : memref<2x4x4x128xf32, #tpu.memory_space<vmem>>, vector<1x1x4x128xf32>
    %106 = vector.shape_cast %105 : vector<1x1x4x128xf32> to vector<4x128xf32>
    %c1_81 = arith.constant 1 : index
    %c3_82 = arith.constant 3 : index
    %c0_83 = arith.constant 0 : index
    %c0_84 = arith.constant 0 : index
    %107 = vector.load %arg3[%c1_81, %c3_82, %c0_83, %c0_84] : memref<2x4x4x128xf32, #tpu.memory_space<vmem>>, vector<1x1x4x128xf32>
    %108 = vector.shape_cast %107 : vector<1x1x4x128xf32> to vector<4x128xf32>
    %109 = arith.subf %106, %102 : vector<4x128xf32>
    %cst_85 = arith.constant 1.000000e+00 : f32
    %110 = vector.broadcast %cst_85 : f32 to vector<4x128xf32>
    %111 = arith.addf %109, %110 : vector<4x128xf32>
    %112 = arith.subf %108, %104 : vector<4x128xf32>
    %cst_86 = arith.constant 1.000000e+00 : f32
    %113 = vector.broadcast %cst_86 : f32 to vector<4x128xf32>
    %114 = arith.addf %112, %113 : vector<4x128xf32>
    %cst_87 = arith.constant 5.000000e-01 : f32
    %115 = vector.broadcast %cst_87 : f32 to vector<4x128xf32>
    %116 = arith.mulf %115, %111 : vector<4x128xf32>
    %117 = arith.addf %102, %116 : vector<4x128xf32>
    %cst_88 = arith.constant 5.000000e-01 : f32
    %118 = vector.broadcast %cst_88 : f32 to vector<4x128xf32>
    %119 = arith.mulf %118, %114 : vector<4x128xf32>
    %120 = arith.addf %104, %119 : vector<4x128xf32>
    %c1_89 = arith.constant 1 : index
    %c0_90 = arith.constant 0 : index
    %c0_91 = arith.constant 0 : index
    %c0_92 = arith.constant 0 : index
    %121 = vector.load %arg4[%c1_89, %c0_90, %c0_91, %c0_92] : memref<2x4x4x128xf32, #tpu.memory_space<vmem>>, vector<1x1x4x128xf32>
    %122 = vector.shape_cast %121 : vector<1x1x4x128xf32> to vector<4x128xf32>
    %c1_93 = arith.constant 1 : index
    %c1_94 = arith.constant 1 : index
    %c0_95 = arith.constant 0 : index
    %c0_96 = arith.constant 0 : index
    %123 = vector.load %arg4[%c1_93, %c1_94, %c0_95, %c0_96] : memref<2x4x4x128xf32, #tpu.memory_space<vmem>>, vector<1x1x4x128xf32>
    %124 = vector.shape_cast %123 : vector<1x1x4x128xf32> to vector<4x128xf32>
    %c1_97 = arith.constant 1 : index
    %c2_98 = arith.constant 2 : index
    %c0_99 = arith.constant 0 : index
    %c0_100 = arith.constant 0 : index
    %125 = vector.load %arg4[%c1_97, %c2_98, %c0_99, %c0_100] : memref<2x4x4x128xf32, #tpu.memory_space<vmem>>, vector<1x1x4x128xf32>
    %126 = vector.shape_cast %125 : vector<1x1x4x128xf32> to vector<4x128xf32>
    %cst_101 = arith.constant 4.13516665 : f32
    %127 = vector.broadcast %cst_101 : f32 to vector<4x128xf32>
    %128 = arith.minimumf %126, %127 : vector<4x128xf32>
    %c1_102 = arith.constant 1 : index
    %c3_103 = arith.constant 3 : index
    %c0_104 = arith.constant 0 : index
    %c0_105 = arith.constant 0 : index
    %129 = vector.load %arg4[%c1_102, %c3_103, %c0_104, %c0_105] : memref<2x4x4x128xf32, #tpu.memory_space<vmem>>, vector<1x1x4x128xf32>
    %130 = vector.shape_cast %129 : vector<1x1x4x128xf32> to vector<4x128xf32>
    %cst_106 = arith.constant 4.13516665 : f32
    %131 = vector.broadcast %cst_106 : f32 to vector<4x128xf32>
    %132 = arith.minimumf %130, %131 : vector<4x128xf32>
    %133 = arith.mulf %122, %111 : vector<4x128xf32>
    %134 = arith.addf %133, %117 : vector<4x128xf32>
    %135 = arith.mulf %124, %114 : vector<4x128xf32>
    %136 = arith.addf %135, %120 : vector<4x128xf32>
    %137 = math.exp %128 : vector<4x128xf32>
    %138 = arith.mulf %137, %111 : vector<4x128xf32>
    %139 = math.exp %132 : vector<4x128xf32>
    %140 = arith.mulf %139, %114 : vector<4x128xf32>
    %cst_107 = arith.constant 5.000000e-01 : f32
    %141 = vector.broadcast %cst_107 : f32 to vector<4x128xf32>
    %142 = arith.mulf %141, %138 : vector<4x128xf32>
    %143 = arith.subf %134, %142 : vector<4x128xf32>
    %cst_108 = arith.constant 0.000000e+00 : f32
    %144 = vector.broadcast %cst_108 : f32 to vector<4x128xf32>
    %145 = arith.maximumf %144, %143 : vector<4x128xf32>
    %146 = vector.broadcast %96 : f32 to vector<4x128xf32>
    %147 = arith.minimumf %146, %145 : vector<4x128xf32>
    %c1_109 = arith.constant 1 : index
    %c0_110 = arith.constant 0 : index
    %c0_111 = arith.constant 0 : index
    %c0_112 = arith.constant 0 : index
    %148 = vector.load %arg5[%c1_109, %c0_110, %c0_111, %c0_112] : memref<2x4x4x128xf32, #tpu.memory_space<vmem>>, vector<1x1x4x128xf32>
    %149 = vector.shape_cast %148 : vector<1x1x4x128xf32> to vector<4x128xf32>
    %150 = vector.shape_cast %147 : vector<4x128xf32> to vector<1x1x4x128xf32>
    tpu.vector_store %arg5[%c1_109, %c0_110, %c0_111, %c0_112], %150 {strides = array<i32>} : memref<2x4x4x128xf32, #tpu.memory_space<vmem>>, vector<1x1x4x128xf32>,
    %cst_113 = arith.constant 5.000000e-01 : f32
    %151 = vector.broadcast %cst_113 : f32 to vector<4x128xf32>
    %152 = arith.mulf %151, %140 : vector<4x128xf32>
    %153 = arith.subf %136, %152 : vector<4x128xf32>
    %cst_114 = arith.constant 0.000000e+00 : f32
    %154 = vector.broadcast %cst_114 : f32 to vector<4x128xf32>
    %155 = arith.maximumf %154, %153 : vector<4x128xf32>
    %156 = vector.broadcast %100 : f32 to vector<4x128xf32>
    %157 = arith.minimumf %156, %155 : vector<4x128xf32>
    %c1_115 = arith.constant 1 : index
    %c1_116 = arith.constant 1 : index
    %c0_117 = arith.constant 0 : index
    %c0_118 = arith.constant 0 : index
    %158 = vector.load %arg5[%c1_115, %c1_116, %c0_117, %c0_118] : memref<2x4x4x128xf32, #tpu.memory_space<vmem>>, vector<1x1x4x128xf32>
    %159 = vector.shape_cast %158 : vector<1x1x4x128xf32> to vector<4x128xf32>
    %160 = vector.shape_cast %157 : vector<4x128xf32> to vector<1x1x4x128xf32>
    tpu.vector_store %arg5[%c1_115, %c1_116, %c0_117, %c0_118], %160 {strides = array<i32>} : memref<2x4x4x128xf32, #tpu.memory_space<vmem>>, vector<1x1x4x128xf32>,
    %cst_119 = arith.constant 5.000000e-01 : f32
    %161 = vector.broadcast %cst_119 : f32 to vector<4x128xf32>
    %162 = arith.mulf %161, %138 : vector<4x128xf32>
    %163 = arith.addf %134, %162 : vector<4x128xf32>
    %cst_120 = arith.constant 1.000000e+00 : f32
    %164 = vector.broadcast %cst_120 : f32 to vector<4x128xf32>
    %165 = arith.subf %163, %164 : vector<4x128xf32>
    %cst_121 = arith.constant 0.000000e+00 : f32
    %166 = vector.broadcast %cst_121 : f32 to vector<4x128xf32>
    %167 = arith.maximumf %166, %165 : vector<4x128xf32>
    %168 = vector.broadcast %96 : f32 to vector<4x128xf32>
    %169 = arith.minimumf %168, %167 : vector<4x128xf32>
    %c1_122 = arith.constant 1 : index
    %c2_123 = arith.constant 2 : index
    %c0_124 = arith.constant 0 : index
    %c0_125 = arith.constant 0 : index
    %170 = vector.load %arg5[%c1_122, %c2_123, %c0_124, %c0_125] : memref<2x4x4x128xf32, #tpu.memory_space<vmem>>, vector<1x1x4x128xf32>
    %171 = vector.shape_cast %170 : vector<1x1x4x128xf32> to vector<4x128xf32>
    %172 = vector.shape_cast %169 : vector<4x128xf32> to vector<1x1x4x128xf32>
    tpu.vector_store %arg5[%c1_122, %c2_123, %c0_124, %c0_125], %172 {strides = array<i32>} : memref<2x4x4x128xf32, #tpu.memory_space<vmem>>, vector<1x1x4x128xf32>,
    %cst_126 = arith.constant 5.000000e-01 : f32
    %173 = vector.broadcast %cst_126 : f32 to vector<4x128xf32>
    %174 = arith.mulf %173, %140 : vector<4x128xf32>
    %175 = arith.addf %136, %174 : vector<4x128xf32>
    %cst_127 = arith.constant 1.000000e+00 : f32
    %176 = vector.broadcast %cst_127 : f32 to vector<4x128xf32>
    %177 = arith.subf %175, %176 : vector<4x128xf32>
    %cst_128 = arith.constant 0.000000e+00 : f32
    %178 = vector.broadcast %cst_128 : f32 to vector<4x128xf32>
    %179 = arith.maximumf %178, %177 : vector<4x128xf32>
    %180 = vector.broadcast %100 : f32 to vector<4x128xf32>
    %181 = arith.minimumf %180, %179 : vector<4x128xf32>
    %c1_129 = arith.constant 1 : index
    %c3_130 = arith.constant 3 : index
    %c0_131 = arith.constant 0 : index
    %c0_132 = arith.constant 0 : index
    %182 = vector.load %arg5[%c1_129, %c3_130, %c0_131, %c0_132] : memref<2x4x4x128xf32, #tpu.memory_space<vmem>>, vector<1x1x4x128xf32>
    %183 = vector.shape_cast %182 : vector<1x1x4x128xf32> to vector<4x128xf32>
    %184 = vector.shape_cast %181 : vector<4x128xf32> to vector<1x1x4x128xf32>
    tpu.vector_store %arg5[%c1_129, %c3_130, %c0_131, %c0_132], %184 {strides = array<i32>} : memref<2x4x4x128xf32, #tpu.memory_space<vmem>>, vector<1x1x4x128xf32>,
    return
  }
  func.func @transform_0(%arg0: i32, %arg1: i32, %arg2: memref<2x2xf32, #tpu.memory_space<smem>>) -> (i32, i32, i32, i32) {
    %c0_i32 = arith.constant 0 : i32
    %c0_i32_0 = arith.constant 0 : i32
    %c0_i32_1 = arith.constant 0 : i32
    return %arg0, %c0_i32, %arg1, %c0_i32_0 : i32, i32, i32, i32
  }
  func.func @transform_1(%arg0: i32, %arg1: i32, %arg2: memref<2x2xf32, #tpu.memory_space<smem>>) -> (i32, i32, i32, i32) {
    %c0_i32 = arith.constant 0 : i32
    %c0_i32_0 = arith.constant 0 : i32
    %c0_i32_1 = arith.constant 0 : i32
    return %arg0, %c0_i32, %arg1, %c0_i32_0 : i32, i32, i32, i32
  }
  func.func @transform_2(%arg0: i32, %arg1: i32, %arg2: memref<2x2xf32, #tpu.memory_space<smem>>) -> (i32, i32, i32, i32) {
    %c0_i32 = arith.constant 0 : i32
    %c0_i32_0 = arith.constant 0 : i32
    %c0_i32_1 = arith.constant 0 : i32
    return %arg0, %c0_i32, %arg1, %c0_i32_0 : i32, i32, i32, i32
  }
}

</mosaic_0001>

<llo_original>
// kernel: tpu_custom_call.1
$region0: #{tpu_custom_call.1}
  #allocation0 [shape = 'u32[]', space=smem, size = 0x4, offset = 0x4, fixed_abs, tag = 'smem constant byte address 0x4 - core index']
  #allocation1 [shape = 'u32[144,128]{1,0:T(1,128)}', space=vmem, size = 0x12000, scoped, tag = 'internal scratch']
  #allocation2 [shape = 's32[1]{0}', space=sflag, size = 0x4, scoped, tag = 'scoped memory for tpu_custom_call.1']
  #allocation3 [shape = 'u8[1024]{0}', space=smem, size = 0x400, scoped, tag = 'prefetched SMEM operand 0']
  %s0 = inlined_call_operand.hbm [shape: f32[2,2], index: 0, kind: input, shape index: {}]
  %s1 = inlined_call_operand.hbm [shape: f32[2,4,4,128], index: 1, kind: input, shape index: {}]
  %s2 = inlined_call_operand.hbm [shape: f32[2,4,4,128], index: 2, kind: input, shape index: {}]
  %s3 = inlined_call_operand.hbm [shape: f32[2,4,4,128], index: 3, kind: output, shape index: {}]
  %s4 = sld [smem:[#allocation0]]
  $region26: #{tpu_custom_call.1} parent=0
    _
  %s6 = ssub.s32 1, %s4
  %s7 = scalar_select 0, %s6, %s4
  %9 = dma.hbm_to_smem %s0, 32, [#allocation3], [#allocation2]
  %10 = dma.done [#allocation2], 32
  %11 = sfence
  $region1: #{tpu_custom_call.1} parent=0
    #allocation4 [shape = 'u8[16384]{0}', space=vmem, size = 0x4000, scoped, tag = 'input window, operand 1, single buffered']
    #allocation5 [shape = 's32[1]{0}', space=sflag, size = 0x4, scoped, tag = 'scoped memory for tpu_custom_call.1']
    #allocation6 [shape = 's32[1]{0}', space=sflag, size = 0x4, scoped, tag = 'scoped memory for tpu_custom_call.1']
    #allocation7 [shape = 'u8[16384]{0}', space=vmem, size = 0x4000, scoped, tag = 'input window, operand 2, single buffered']
    #allocation8 [shape = 's32[1]{0}', space=sflag, size = 0x4, scoped, tag = 'scoped memory for tpu_custom_call.1']
    #allocation9 [shape = 'u8[16384]{0}', space=vmem, size = 0x4000, scoped, tag = 'output window, operand 0, single buffered']
    %12 = vsyncpa [#allocation5], 0
    %13 = vsyncpa [#allocation8], 0
    %14 = vsyncpa [#allocation6], 0
    // Predicated region
    $region2: #{tpu_custom_call.1} parent=1 // pred_check
      _
    $region3: #{tpu_custom_call.1} parent=1 // pred_check_branch
      %16 = sbr.rel (0) target = $region5
    $region4: #{tpu_custom_call.1} parent=1 // pred_region
      %s18 = ssub.s32 512, 512
      %19 = vsyncadd [#allocation5], %s18
      %s20 = sshll.u32 [#allocation4], 4
      %s21 = int_to_ptr.vmem [resolvable:$true] %s20
      %26 = dma.hbm_to_vmem [thread:$0]  %s1, 512, %s21, [#allocation5], 64, 64, 4
    $region5: #{tpu_custom_call.1} parent=1 // pred_fallthru
      _
    // Predicated region
    $region6: #{tpu_custom_call.1} parent=1 // pred_check
      _
    $region7: #{tpu_custom_call.1} parent=1 // pred_check_branch
      %28 = sbr.rel (0) target = $region9
    $region8: #{tpu_custom_call.1} parent=1 // pred_region
      %s30 = ssub.s32 512, 512
      %31 = vsyncadd [#allocation8], %s30
      %s32 = sshll.u32 [#allocation7], 4
      %s33 = int_to_ptr.vmem [resolvable:$true] %s32
      %38 = dma.hbm_to_vmem [thread:$0]  %s2, 512, %s33, [#allocation8], 64, 64, 4
    $region9: #{tpu_custom_call.1} parent=1 // pred_fallthru
      _
    // Predicated region
    $region10: #{tpu_custom_call.1} parent=1 // pred_check
      _
    $region11: #{tpu_custom_call.1} parent=1 // pred_check_branch
      %40 = sbr.rel (0) target = $region13
    $region12: #{tpu_custom_call.1} parent=1 // pred_region
      %41 = dma.done [#allocation5], 512
    $region13: #{tpu_custom_call.1} parent=1 // pred_fallthru
      _
    // Predicated region
    $region14: #{tpu_custom_call.1} parent=1 // pred_check
      _
    $region15: #{tpu_custom_call.1} parent=1 // pred_check_branch
      %43 = sbr.rel (0) target = $region17
    $region16: #{tpu_custom_call.1} parent=1 // pred_region
      %44 = dma.done [#allocation8], 512
    $region17: #{tpu_custom_call.1} parent=1 // pred_fallthru
      _
    %s45 = smul.u32 0, 2
    %s46 = smul.u32 %s45, 128
    %s47 = sld [smem:[#allocation3 + %s46]]
    %s48 = ssub.f32 %s47, 1.0
    %s49 = sadd.s32 %s46, 1
    %s50 = sld [smem:[#allocation3 + %s49]]
    %s51 = ssub.f32 %s50, 1.0
    %v52 = vld [vmem:[#allocation4] sm:$0xf]
    %s53 = scalar_lea.vmem [#allocation4], 4
    %v54 = vld [vmem:[%s53] sm:$0xf]
    %s55 = scalar_lea.vmem [#allocation4], 8
    %v56 = vld [vmem:[%s55] sm:$0xf]
    %s57 = scalar_lea.vmem [#allocation4], 12
    %v58 = vld [vmem:[%s57] sm:$0xf]
    %v59 = vsub.f32 %v56, %v52
    %v60 = vadd.f32 %v59, 1.0
    %v61 = vsub.f32 %v58, %v54
    %v62 = vadd.f32 %v61, 1.0
    %v63 = vmul.f32 %v60, 0.5
    %v64 = vadd.f32 %v52, %v63
    %v65 = vmul.f32 %v62, 0.5
    %v66 = vadd.f32 %v54, %v65
    %v67 = vld [vmem:[#allocation7] sm:$0xf]
    %s68 = scalar_lea.vmem [#allocation7], 4
    %v69 = vld [vmem:[%s68] sm:$0xf]
    %s70 = scalar_lea.vmem [#allocation7], 8
    %v71 = vld [vmem:[%s70] sm:$0xf]
    %v72 = vmin.f32 %v71, 4.1351666
    %s73 = scalar_lea.vmem [#allocation7], 12
    %v74 = vld [vmem:[%s73] sm:$0xf]
    %v75 = vmin.f32 %v74, 4.1351666
    %v76 = vmul.f32 %v67, %v60
    %v77 = vadd.f32 %v76, %v64
    %v78 = vmul.f32 %v69, %v62
    %v79 = vadd.f32 %v78, %v66
    %v80 = vmul.f32 %v72, 1.442695
    %v81 = vpow.pop %v80
    %v82 = vmul.f32 %v81, %v60
    %v83 = vmul.f32 %v75, 1.442695
    %v84 = vpow.pop %v83
    %v85 = vmul.f32 %v84, %v62
    %v86 = vmul.f32 %v82, 0.5
    %v87 = vsub.f32 %v77, %v86
    %v88 = vmax.f32 %v87, 0.0
    %v89 = vstv %s48
    %v90 = vmin.f32 %v89, %v88
    %91 = vst [vmem:[#allocation9] sm:$0xf] %v90
    %v92 = vmul.f32 %v85, 0.5
    %v93 = vsub.f32 %v79, %v92
    %v94 = vmax.f32 %v93, 0.0
    %v95 = vstv %s51
    %v96 = vmin.f32 %v95, %v94
    %s97 = scalar_lea.vmem [#allocation9], 4
    %98 = vst [vmem:[%s97] sm:$0xf] %v96
    %v99 = vadd.f32 %v77, %v86
    %v100 = vsub.f32 %v99, 1.0
    %v101 = vmax.f32 %v100, 0.0
    %v102 = vmin.f32 %v89, %v101
    %s103 = scalar_lea.vmem [#allocation9], 8
    %104 = vst [vmem:[%s103] sm:$0xf] %v102
    %v105 = vadd.f32 %v79, %v92
    %v106 = vsub.f32 %v105, 1.0
    %v107 = vmax.f32 %v106, 0.0
    %v108 = vmin.f32 %v95, %v107
    %s109 = scalar_lea.vmem [#allocation9], 12
    %110 = vst [vmem:[%s109] sm:$0xf] %v108
    %s111 = sadd.s32 %s45, 1
    %s112 = smul.u32 %s111, 128
    %s113 = sld [smem:[#allocation3 + %s112]]
    %s114 = ssub.f32 %s113, 1.0
    %s115 = sadd.s32 %s112, 1
    %s116 = sld [smem:[#allocation3 + %s115]]
    %s117 = ssub.f32 %s116, 1.0
    %s118 = scalar_lea.vmem [#allocation4], 16
    %v119 = vld [vmem:[%s118] sm:$0xf]
    %s120 = scalar_lea.vmem [#allocation4], 20
    %v121 = vld [vmem:[%s120] sm:$0xf]
    %s122 = scalar_lea.vmem [#allocation4], 24
    %v123 = vld [vmem:[%s122] sm:$0xf]
    %s124 = scalar_lea.vmem [#allocation4], 28
    %v125 = vld [vmem:[%s124] sm:$0xf]
    %v126 = vsub.f32 %v123, %v119
    %v127 = vadd.f32 %v126, 1.0
    %v128 = vsub.f32 %v125, %v121
    %v129 = vadd.f32 %v128, 1.0
    %v130 = vmul.f32 %v127, 0.5
    %v131 = vadd.f32 %v119, %v130
    %v132 = vmul.f32 %v129, 0.5
    %v133 = vadd.f32 %v121, %v132
    %s134 = scalar_lea.vmem [#allocation7], 16
    %v135 = vld [vmem:[%s134] sm:$0xf]
    %s136 = scalar_lea.vmem [#allocation7], 20
    %v137 = vld [vmem:[%s136] sm:$0xf]
    %s138 = scalar_lea.vmem [#allocation7], 24
    %v139 = vld [vmem:[%s138] sm:$0xf]
    %v140 = vmin.f32 %v139, 4.1351666
    %s141 = scalar_lea.vmem [#allocation7], 28
    %v142 = vld [vmem:[%s141] sm:$0xf]
    %v143 = vmin.f32 %v142, 4.1351666
    %v144 = vmul.f32 %v135, %v127
    %v145 = vadd.f32 %v144, %v131
    %v146 = vmul.f32 %v137, %v129
    %v147 = vadd.f32 %v146, %v133
    %v148 = vmul.f32 %v140, 1.442695
    %v149 = vpow.pop %v148
    %v150 = vmul.f32 %v149, %v127
    %v151 = vmul.f32 %v143, 1.442695
    %v152 = vpow.pop %v151
    %v153 = vmul.f32 %v152, %v129
    %v154 = vmul.f32 %v150, 0.5
    %v155 = vsub.f32 %v145, %v154
    %v156 = vmax.f32 %v155, 0.0
    %v157 = vstv %s114
    %v158 = vmin.f32 %v157, %v156
    %s159 = scalar_lea.vmem [#allocation9], 16
    %160 = vst [vmem:[%s159] sm:$0xf] %v158
    %v161 = vmul.f32 %v153, 0.5
    %v162 = vsub.f32 %v147, %v161
    %v163 = vmax.f32 %v162, 0.0
    %v164 = vstv %s117
    %v165 = vmin.f32 %v164, %v163
    %s166 = scalar_lea.vmem [#allocation9], 20
    %167 = vst [vmem:[%s166] sm:$0xf] %v165
    %v168 = vadd.f32 %v145, %v154
    %v169 = vsub.f32 %v168, 1.0
    %v170 = vmax.f32 %v169, 0.0
    %v171 = vmin.f32 %v157, %v170
    %s172 = scalar_lea.vmem [#allocation9], 24
    %173 = vst [vmem:[%s172] sm:$0xf] %v171
    %v174 = vadd.f32 %v147, %v161
    %v175 = vsub.f32 %v174, 1.0
    %v176 = vmax.f32 %v175, 0.0
    %v177 = vmin.f32 %v164, %v176
    %s178 = scalar_lea.vmem [#allocation9], 28
    %179 = vst [vmem:[%s178] sm:$0xf] %v177
    // Predicated region
    $region18: #{tpu_custom_call.1} parent=1 // pred_check
      _
    $region19: #{tpu_custom_call.1} parent=1 // pred_check_branch
      %181 = sbr.rel (0) target = $region21
    $region20: #{tpu_custom_call.1} parent=1 // pred_region
      %s183 = ssub.s32 512, 512
      %184 = vsyncadd [#allocation6], %s183
      %s185 = sshll.u32 [#allocation9], 4
      %s186 = int_to_ptr.vmem [resolvable:$true] %s185
      %191 = dma.vmem_to_hbm [thread:$0]  %s186, 512, %s3, [#allocation6], 64, 64, 4
    $region21: #{tpu_custom_call.1} parent=1 // pred_fallthru
      _
    // Predicated region
    $region22: #{tpu_custom_call.1} parent=1 // pred_check
      _
    $region23: #{tpu_custom_call.1} parent=1 // pred_check_branch
      %193 = sbr.rel (0) target = $region25
    $region24: #{tpu_custom_call.1} parent=1 // pred_region
      %194 = dma.done [#allocation6], 512
    $region25: #{tpu_custom_call.1} parent=1 // pred_fallthru
      _
    %195 = vsyncpa [#allocation5], 1
    %196 = vsyncpa [#allocation8], 1
    %197 = vsyncpa [#allocation6], 1

</llo_original>
